<compile_context>
chip_gen: v7x
topology: tpu7x:2x2x1
jax: 0.10.0
libtpu: 0.0.40
codegen_flags: <defaults>
</compile_context>

<pallas_src>
import functools
import math

import jax
import jax.numpy as jnp
from jax.experimental import pallas as pl
from jax.experimental.pallas import tpu as pltpu

_VMEM_BUDGET = 32 * 1024 * 1024  # in-kernel buffer budget (bytes)


def _round_up(x, m):
    return (x + m - 1) // m * m


def _sublane(dtype):
    # sublane packing: f32 -> 8, bf16 -> 16, int8/fp8 -> 32
    return max(8, 32 // jnp.dtype(dtype).itemsize)


def _gelu_exact_f32(x):
    # nn.GELU() default is the exact (erf) formulation; keep it in f32.
    return 0.5 * x * (1.0 + jax.lax.erf(x * (1.0 / math.sqrt(2.0))))


# ---------------------------------------------------------------------------
# Kernels
# ---------------------------------------------------------------------------

def _linear_kernel(x_ref, w_ref, b_ref, o_ref, *, apply_gelu):
    """Full-K tile: o = (x @ w) + b [; GELU].  Accumulation stays in vregs/MRB."""
    y = jnp.dot(x_ref[...], w_ref[...], preferred_element_type=jnp.float32)
    y = y + b_ref[...].astype(jnp.float32)
    if apply_gelu:
        y = _gelu_exact_f32(y)
    o_ref[...] = y.astype(o_ref.dtype)


def _linear_kernel_ksplit(x_ref, w_ref, b_ref, o_ref, acc_ref, *, apply_gelu):
    """Fallback when K must be tiled: f32 VMEM accumulator over the K axis."""
    k = pl.program_id(2)

    @pl.when(k == 0)
    def _():
        acc_ref[...] = jnp.zeros_like(acc_ref)

    acc_ref[...] += jnp.dot(x_ref[...], w_ref[...],
                            preferred_element_type=jnp.float32)

    @pl.when(k == pl.num_programs(2) - 1)
    def _():
        y = acc_ref[...] + b_ref[...].astype(jnp.float32)
        if apply_gelu:
            y = _gelu_exact_f32(y)
        o_ref[...] = y.astype(o_ref.dtype)


# ---------------------------------------------------------------------------
# Tile planning
# ---------------------------------------------------------------------------

def _buffer_bytes(tm, tk, tn, ksplit, x_b, w_b, o_b):
    total = 2 * (tm * tk * x_b + tk * tn * w_b + tn * 4 + tm * tn * o_b)
    if ksplit:
        total += tm * tn * 4  # f32 accumulator scratch
    return total


def _select_tiles(Mp, Kp, Np, x_b, w_b, o_b, sub_m, budget=_VMEM_BUDGET):
    """Prefer tm = full M and tk = full K (weights read exactly once, no acc).

    If over the VMEM budget: shrink tn first (but not below 256), then tk
    (re-streams only the small activations), and tm only as a last resort
    (which would re-stream the large weights)."""
    def cost(tm, tk, tn):
        return _buffer_bytes(tm, tk, tn, tk < Kp, x_b, w_b, o_b)

    tn = Np if Np <= 512 else next(t for t in (512, 384, 256, 128) if Np % t == 0)
    tm, tk = Mp, Kp
    if cost(tm, tk, tn) <= budget:
        return tm, tk, tn
    for cand in (512, 384, 256):
        if tn > cand and Np % cand == 0:
            tn = cand
            if cost(tm, tk, tn) <= budget:
                return tm, tk, tn
    for cand in range(Kp - 128, 0, -128):
        if Kp % cand == 0:
            tk = cand
            if cost(tm, tk, tn) <= budget:
                return tm, tk, tn
    for cand in range(Mp - sub_m, 0, -sub_m):
        if Mp % cand == 0:
            tm = cand
            if cost(tm, tk, tn) <= budget:
                return tm, tk, tn
    return tm, tk, tn


# ---------------------------------------------------------------------------
# Fused linear (+ optional GELU epilogue)
# ---------------------------------------------------------------------------

def fused_linear(x, w, b, *, apply_gelu, out_dtype=None, tiles=None):
    """y = x @ w + b, optionally followed by exact GELU, in one Pallas call.

    All operands must already be tile-aligned (padding is hoisted to init /
    the forward wrapper):
      x: (Mp, Kp)  activations, Mp % sublane-pack == 0, Kp % 128 == 0
      w: (Kp, Np)  weight, ALREADY transposed from torch (out, in) layout
      b: (1,  Np)  bias
    """
    Mp, Kp = x.shape
    Kp2, Np = w.shape
    assert Kp == Kp2, (Kp, Kp2)
    assert b.shape == (1, Np), b.shape
    out_dtype = jnp.dtype(out_dtype if out_dtype is not None else x.dtype)
    x_b = jnp.dtype(x.dtype).itemsize
    w_b = jnp.dtype(w.dtype).itemsize
    o_b = out_dtype.itemsize
    sub_m = max(_sublane(x.dtype), _sublane(out_dtype))
    assert Mp % sub_m == 0 and Kp % 128 == 0 and Np % 128 == 0, (Mp, Kp, Np)

    if tiles is None:
        tm, tk, tn = _select_tiles(Mp, Kp, Np, x_b, w_b, o_b, sub_m)
    else:
        tm, tk, tn = tiles
    ksplit = tk < Kp

    buf = _buffer_bytes(tm, tk, tn, ksplit, x_b, w_b, o_b)
    vmem_limit = int(min(max(buf + (12 << 20), 32 << 20), 48 << 20))

    cost = pl.CostEstimate(
        flops=2 * Mp * Np * Kp,
        transcendentals=Mp * Np if apply_gelu else 0,
        bytes_accessed=(Mp * Kp * x_b * (Np // tn)
                        + Kp * Np * w_b * (Mp // tm)
                        + Np * 4
                        + Mp * Np * o_b),
    )

    if not ksplit:
        # Single K block: weights read exactly once, no scratch accumulator.
        grid = (Mp // tm, Np // tn)
        kernel = functools.partial(_linear_kernel, apply_gelu=apply_gelu)
        in_specs = [
            pl.BlockSpec((tm, tk), lambda i, j: (i, 0)),   # activations
            pl.BlockSpec((tk, tn), lambda i, j: (0, j)),   # weight (K, N)
            pl.BlockSpec((1, tn), lambda i, j: (0, j)),    # bias
        ]
        out_specs = pl.BlockSpec((tm, tn), lambda i, j: (i, j))
        scratch = []
        dims = ("parallel", "parallel")
        # TODO(synk): on v7x, switch the N axis to pltpu.CORE_PARALLEL (needs
        # >=2 N tiles) for a true 2-TensorCore split.
    else:
        grid = (Mp // tm, Np // tn, Kp // tk)
        kernel = functools.partial(_linear_kernel_ksplit, apply_gelu=apply_gelu)
        in_specs = [
            pl.BlockSpec((tm, tk), lambda i, j, k: (i, k)),
            pl.BlockSpec((tk, tn), lambda i, j, k: (k, j)),
            pl.BlockSpec((1, tn), lambda i, j, k: (0, j)),
        ]
        out_specs = pl.BlockSpec((tm, tn), lambda i, j, k: (i, j))
        scratch = [pltpu.VMEM((tm, tn), jnp.float32)]
        dims = ("parallel", "parallel", "arbitrary")

    return pl.pallas_call(
        kernel,
        out_shape=jax.ShapeDtypeStruct((Mp, Np), out_dtype),
        grid_spec=pltpu.PrefetchScalarGridSpec(
            num_scalar_prefetch=0,
            grid=grid,
            in_specs=in_specs,
            out_specs=out_specs,
            scratch_shapes=scratch,
        ),
        compiler_params=pltpu.CompilerParams(
            dimension_semantics=dims,
            vmem_limit_bytes=vmem_limit,
        ),
        cost_estimate=cost,
    )(x, w, b)


# ---------------------------------------------------------------------------
# Module-level params / forward
# ---------------------------------------------------------------------------

def init_linear_proj_params(key, mm_hidden_size, hidden_size, mlp_depth,
                            param_dtype=jnp.bfloat16):
    """Synthetic params matching nn.Linear init scale.

    Weights are generated in torch (out, in) layout, transposed ONCE to
    (in, out), cast to `param_dtype` (bf16 by default — f32 accumulation keeps
    accuracy) and zero-padded to lane multiples here, so no transpose / pad
    ever happens on the forward path.  Returns [(w_kn_padded, bias_padded_1xN,
    real_out_dim), ...].
    """
    params = []
    in_dim = mm_hidden_size
    for _ in range(mlp_depth):
        key, kw, kb = jax.random.split(key, 3)
        bound = 1.0 / math.sqrt(in_dim)
        w_torch = jax.random.uniform(kw, (hidden_size, in_dim), jnp.float32,
                                     -bound, bound)
        b = jax.random.uniform(kb, (hidden_size,), jnp.float32, -bound, bound)
        kp = _round_up(in_dim, 128)
        npad = _round_up(hidden_size, 128)
        w_kn = jnp.pad(w_torch.T.astype(param_dtype),
                       ((0, kp - in_dim), (0, npad - hidden_size)))
        b2d = jnp.pad(b, (0, npad - hidden_size)).reshape(1, npad)
        params.append((w_kn, b2d, hidden_size))
        in_dim = hidden_size
    return params


def linear_proj_forward(x, params):
    """x: (batch, seq, mm_hidden_size) -> (batch, seq, hidden_size).

    Activations stay padded (zero columns/rows) between layers — padded K rows
    of every weight are zero, so the pads contribute nothing; the single
    un-pad slice happens at the very end.
    """
    B, S, K0 = x.shape
    out_dtype = x.dtype
    compute_dtype = params[0][0].dtype
    M = B * S
    Kp0 = params[0][0].shape[0]
    sub_m = max(_sublane(compute_dtype), _sublane(out_dtype))
    Mp = _round_up(M, sub_m)
    h = jnp.pad(x.reshape(M, K0), ((0, Mp - M), (0, Kp0 - K0))).astype(compute_dtype)

    n_layers = len(params)
    for i, (w_kn, b2d, _) in enumerate(params):
        last = (i == n_layers - 1)
        # GELU sits between linears in the nn.Sequential: fuse it as the
        # epilogue of every layer except the last.
        h = fused_linear(h, w_kn, b2d, apply_gelu=not last,
                         out_dtype=out_dtype if last else compute_dtype)

    n_out = params[-1][2]
    return h[:M, :n_out].reshape(B, S, n_out)


def _reference_forward(x, params):
    """Pure-JAX f32 reference using the same (bf16) stored params."""
    B, S, K0 = x.shape
    M = B * S
    Kp0 = params[0][0].shape[0]
    h = jnp.pad(x.reshape(M, K0).astype(jnp.float32), ((0, 0), (0, Kp0 - K0)))
    n_layers = len(params)
    for i, (w_kn, b2d, _) in enumerate(params):
        h = h @ w_kn.astype(jnp.float32) + b2d.astype(jnp.float32)[0]
        if i < n_layers - 1:
            h = _gelu_exact_f32(h)
    return h[:, :params[-1][2]].reshape(B, S, -1)


if __name__ == "__main__":
    # Small config consistent with the module's forward.
    batch, seq = 2, 8
    mm_hidden_size, hidden_size, mlp_depth = 32, 64, 2

    key = jax.random.PRNGKey(0)
    key, kx = jax.random.split(key)
    x = jax.random.normal(kx, (batch, seq, mm_hidden_size), jnp.float32)
    params = init_linear_proj_params(key, mm_hidden_size, hidden_size, mlp_depth)

    out = jax.block_until_ready(linear_proj_forward(x, params))
    assert out.shape == (batch, seq, hidden_size), out.shape

    ref = _reference_forward(x, params)
    # bf16 weights/activations with f32 accumulation -> modest tolerance.
    assert jnp.allclose(out, ref, atol=3e-2, rtol=3e-2), \
        "mismatch vs. pure-JAX reference"

    # Secondary check 1: force the K-split fallback (3-D grid (2,2,2) with the
    # VMEM accumulator + pl.when init/epilogue) in f32.
    M2, K2, N2 = 64, 256, 256
    kx2, kw2, kb2 = jax.random.split(jax.random.PRNGKey(1), 3)
    x2 = jax.random.normal(kx2, (M2, K2), jnp.float32)
    w2 = jax.random.uniform(kw2, (K2, N2), jnp.float32, -0.0625, 0.0625)
    b2 = jax.random.uniform(kb2, (1, N2), jnp.float32, -0.0625, 0.0625)
    y2 = jax.block_until_ready(
        fused_linear(x2, w2, b2, apply_gelu=True, tiles=(32, 128, 128)))
    y2_ref = _gelu_exact_f32(x2 @ w2 + b2)
    assert jnp.allclose(y2, y2_ref, atol=1e-3, rtol=1e-3), "k-split grid mismatch"

    # Secondary check 2: tiled full-K path (2-D grid (2,2), no accumulator).
    y3 = jax.block_until_ready(
        fused_linear(x2, w2, b2, apply_gelu=False, tiles=(32, K2, 128)))
    y3_ref = x2 @ w2 + b2
    assert jnp.allclose(y3, y3_ref, atol=1e-3, rtol=1e-3), "full-K grid mismatch"

    print("KERNEL_OK")
</pallas_src>

<mosaic_0001>
module attributes {stable_mosaic.version = 11 : i64} {
  func.func @_linear_kernel(%arg0: i32, %arg1: i32, %arg2: memref<16x128xbf16, #tpu.memory_space<vmem>>, %arg3: memref<128x128xbf16, #tpu.memory_space<vmem>>, %arg4: memref<1x128xf32, #tpu.memory_space<vmem>>, %arg5: memref<16x128xbf16, #tpu.memory_space<vmem>>) attributes {dimension_semantics = [#tpu.dimension_semantics<parallel>, #tpu.dimension_semantics<parallel>], iteration_bounds = array<i64: 1, 1>, scalar_prefetch = 0 : i64, scratch_operands = 0 : i64, tpu.core_type = #tpu.core_type<tc>, window_params = [{transform_indices = @transform_0, window_bounds = array<i64: 16, 128>}, {transform_indices = @transform_1, window_bounds = array<i64: 128, 128>}, {transform_indices = @transform_2, window_bounds = array<i64: 1, 128>}, {transform_indices = @transform_3, window_bounds = array<i64: 16, 128>}]} {
    %c0 = arith.constant 0 : index
    %c0_0 = arith.constant 0 : index
    %0 = vector.load %arg2[%c0, %c0_0] : memref<16x128xbf16, #tpu.memory_space<vmem>>, vector<16x128xbf16>
    %c0_1 = arith.constant 0 : index
    %c0_2 = arith.constant 0 : index
    %1 = vector.load %arg3[%c0_1, %c0_2] : memref<128x128xbf16, #tpu.memory_space<vmem>>, vector<128x128xbf16>
    %cst = arith.constant dense<0.000000e+00> : vector<16x128xf32>
    %2 = tpu.matmul %0, %1, %cst {dimension_numbers = #tpu.dot_dimension_numbers<[1], [0], [0], [1], [0, 0, 1, 1], [], []>} : vector<16x128xbf16>, vector<128x128xbf16>, vector<16x128xf32> -> vector<16x128xf32>
    %c0_3 = arith.constant 0 : index
    %c0_4 = arith.constant 0 : index
    %3 = vector.load %arg4[%c0_3, %c0_4] : memref<1x128xf32, #tpu.memory_space<vmem>>, vector<1x128xf32>
    %4 = vector.broadcast %3 : vector<1x128xf32> to vector<16x128xf32>
    %5 = arith.addf %2, %4 : vector<16x128xf32>
    %cst_5 = arith.constant 5.000000e-01 : f32
    %6 = vector.broadcast %cst_5 : f32 to vector<16x128xf32>
    %7 = arith.mulf %6, %5 : vector<16x128xf32>
    %cst_6 = arith.constant 0.707106769 : f32
    %8 = vector.broadcast %cst_6 : f32 to vector<16x128xf32>
    %9 = arith.mulf %5, %8 : vector<16x128xf32>
    %10 = math.erf %9 : vector<16x128xf32>
    %cst_7 = arith.constant 1.000000e+00 : f32
    %11 = vector.broadcast %cst_7 : f32 to vector<16x128xf32>
    %12 = arith.addf %11, %10 : vector<16x128xf32>
    %13 = arith.mulf %7, %12 : vector<16x128xf32>
    %14 = arith.truncf %13 : vector<16x128xf32> to vector<16x128xbf16>
    %c0_8 = arith.constant 0 : index
    %c0_9 = arith.constant 0 : index
    %15 = vector.load %arg5[%c0_8, %c0_9] : memref<16x128xbf16, #tpu.memory_space<vmem>>, vector<16x128xbf16>
    tpu.vector_store %arg5[%c0_8, %c0_9], %14 {strides = array<i32>} : memref<16x128xbf16, #tpu.memory_space<vmem>>, vector<16x128xbf16>,
    return
  }
  func.func @transform_0(%arg0: i32, %arg1: i32) -> (i32, i32) {
    %c0_i32 = arith.constant 0 : i32
    %c0_i32_0 = arith.constant 0 : i32
    return %arg0, %c0_i32 : i32, i32
  }
  func.func @transform_1(%arg0: i32, %arg1: i32) -> (i32, i32) {
    %c0_i32 = arith.constant 0 : i32
    %c0_i32_0 = arith.constant 0 : i32
    return %c0_i32, %arg1 : i32, i32
  }
  func.func @transform_2(%arg0: i32, %arg1: i32) -> (i32, i32) {
    %c0_i32 = arith.constant 0 : i32
    %c0_i32_0 = arith.constant 0 : i32
    return %c0_i32, %arg1 : i32, i32
  }
  func.func @transform_3(%arg0: i32, %arg1: i32) -> (i32, i32) {
    %c0_i32 = arith.constant 0 : i32
    return %arg0, %arg1 : i32, i32
  }
}

</mosaic_0001>

<llo_original>
// kernel: tpu_custom_call.1
$region0: #{tpu_custom_call.1}
  #allocation0 [shape = 'u32[]', space=smem, size = 0x4, offset = 0x4, fixed_abs, tag = 'smem constant byte address 0x4 - core index']
  #allocation1 [shape = 'u32[144,128]{1,0:T(1,128)}', space=vmem, size = 0x12000, scoped, tag = 'internal scratch']
  %s0 = inlined_call_operand.hbm [shape: bf16[16,128], index: 0, kind: input, shape index: {}]
  %s1 = inlined_call_operand.hbm [shape: bf16[128,128], index: 1, kind: input, shape index: {}]
  %s2 = inlined_call_operand.vmem [shape: f32[1,128], index: 2, kind: input, shape index: {}]
  %s3 = inlined_call_operand.hbm [shape: bf16[16,128], index: 3, kind: output, shape index: {}]
  %s4 = sld [smem:[#allocation0]]
  $region30: #{tpu_custom_call.1} parent=0
    _
  %s6 = ssub.s32 1, %s4
  %s7 = scalar_select 0, %s6, %s4
  $region1: #{tpu_custom_call.1} parent=0
    #allocation2 [shape = 'u8[4096]{0}', space=vmem, size = 0x1000, scoped, tag = 'input window, operand 0, single buffered']
    #allocation3 [shape = 's32[1]{0}', space=sflag, size = 0x4, scoped, tag = 'scoped memory for tpu_custom_call.1']
    #allocation4 [shape = 's32[1]{0}', space=sflag, size = 0x4, scoped, tag = 'scoped memory for tpu_custom_call.1']
    #allocation5 [shape = 'u8[32768]{0}', space=vmem, size = 0x8000, scoped, tag = 'input window, operand 1, single buffered']
    #allocation6 [shape = 's32[1]{0}', space=sflag, size = 0x4, scoped, tag = 'scoped memory for tpu_custom_call.1']
    #allocation7 [shape = 'u8[4096]{0}', space=vmem, size = 0x1000, scoped, tag = 'output window, operand 0, single buffered']
    %8 = vsyncpa [#allocation3], 0
    %9 = vsyncpa [#allocation6], 0
    %10 = vsyncpa [#allocation4], 0
    // Predicated region
    $region2: #{tpu_custom_call.1} parent=1 // pred_check
      _
    $region3: #{tpu_custom_call.1} parent=1 // pred_check_branch
      %12 = sbr.rel (0) target = $region5
    $region4: #{tpu_custom_call.1} parent=1 // pred_region
      %s14 = ssub.s32 128, 128
      %15 = vsyncadd [#allocation3], %s14
      %s16 = sshll.u32 [#allocation2], 4
      %s17 = int_to_ptr.vmem [resolvable:$true] %s16
      %22 = dma.hbm_to_vmem [thread:$0]  %s0, 128, %s17, [#allocation3], 64, 64, 4
    $region5: #{tpu_custom_call.1} parent=1 // pred_fallthru
      _
    // Predicated region
    $region6: #{tpu_custom_call.1} parent=1 // pred_check
      _
    $region7: #{tpu_custom_call.1} parent=1 // pred_check_branch
      %24 = sbr.rel (0) target = $region9
    $region8: #{tpu_custom_call.1} parent=1 // pred_region
      %s26 = ssub.s32 1024, 1024
      %27 = vsyncadd [#allocation6], %s26
      %s28 = sshll.u32 [#allocation5], 4
      %s29 = int_to_ptr.vmem [resolvable:$true] %s28
      %34 = dma.hbm_to_vmem [thread:$0]  %s1, 1024, %s29, [#allocation6], 64, 64, 4
    $region9: #{tpu_custom_call.1} parent=1 // pred_fallthru
      _
    // Predicated region
    $region10: #{tpu_custom_call.1} parent=1 // pred_check
      _
    $region11: #{tpu_custom_call.1} parent=1 // pred_check_branch
      %36 = sbr.rel (0) target = $region13
    $region12: #{tpu_custom_call.1} parent=1 // pred_region
      _
    $region13: #{tpu_custom_call.1} parent=1 // pred_fallthru
      _
    // Predicated region
    $region14: #{tpu_custom_call.1} parent=1 // pred_check
      _
    $region15: #{tpu_custom_call.1} parent=1 // pred_check_branch
      %38 = sbr.rel (0) target = $region17
    $region16: #{tpu_custom_call.1} parent=1 // pred_region
      %39 = dma.done [#allocation3], 128
    $region17: #{tpu_custom_call.1} parent=1 // pred_fallthru
      _
    // Predicated region
    $region18: #{tpu_custom_call.1} parent=1 // pred_check
      _
    $region19: #{tpu_custom_call.1} parent=1 // pred_check_branch
      %41 = sbr.rel (0) target = $region21
    $region20: #{tpu_custom_call.1} parent=1 // pred_region
      %42 = dma.done [#allocation6], 1024
    $region21: #{tpu_custom_call.1} parent=1 // pred_fallthru
      _
    %v44 = vld [vmem:[#allocation2] sm:$0xf]
    %v45 = vld [vmem:[#allocation2 + $0x4] sm:$0xf]
    %v46 = vld [vmem:[#allocation5] sm:$0xf]
    %v47 = vld [vmem:[#allocation5 + $0x4] sm:$0xf]
    %v48 = vld [vmem:[#allocation5 + $0x8] sm:$0xf]
    %v49 = vld [vmem:[#allocation5 + $0xc] sm:$0xf]
    %v50 = vld [vmem:[#allocation5 + $0x10] sm:$0xf]
    %v51 = vld [vmem:[#allocation5 + $0x14] sm:$0xf]
    %v52 = vld [vmem:[#allocation5 + $0x18] sm:$0xf]
    %v53 = vld [vmem:[#allocation5 + $0x1c] sm:$0xf]
    %v54 = vld [vmem:[#allocation5 + $0x20] sm:$0xf]
    %v55 = vld [vmem:[#allocation5 + $0x24] sm:$0xf]
    %v56 = vld [vmem:[#allocation5 + $0x28] sm:$0xf]
    %v57 = vld [vmem:[#allocation5 + $0x2c] sm:$0xf]
    %v58 = vld [vmem:[#allocation5 + $0x30] sm:$0xf]
    %v59 = vld [vmem:[#allocation5 + $0x34] sm:$0xf]
    %v60 = vld [vmem:[#allocation5 + $0x38] sm:$0xf]
    %v61 = vld [vmem:[#allocation5 + $0x3c] sm:$0xf]
    %v62 = vld [vmem:[%s2] sm:$0x1]
    %v64 = vlaneseq
    %v65 = vshrl.u32 %v64, 7
    %v66 = vsub.s32 0, %v65
    %v67 = vrot.slane %v62, %v66
    %v71 = vunpack.c.l.b16 %v44
    %v72 = vunpack.c.l.b16 %v45
    %v73 = vpack.c.b16 %v72, %v71
    %v91 = vunpack.c.l.b16 %v46
    %v92 = vunpack.c.l.b16 %v47
    %v93 = vunpack.c.l.b16 %v48
    %v94 = vunpack.c.l.b16 %v49
    %v95 = vunpack.c.l.b16 %v50
    %v96 = vunpack.c.l.b16 %v51
    %v97 = vunpack.c.l.b16 %v52
    %v98 = vunpack.c.l.b16 %v53
    %v99 = vunpack.c.l.b16 %v54
    %v100 = vunpack.c.l.b16 %v55
    %v101 = vunpack.c.l.b16 %v56
    %v102 = vunpack.c.l.b16 %v57
    %v103 = vunpack.c.l.b16 %v58
    %v104 = vunpack.c.l.b16 %v59
    %v105 = vunpack.c.l.b16 %v60
    %v106 = vunpack.c.l.b16 %v61
    %v107 = vpack.c.b16 %v92, %v91
    %v108 = vpack.c.b16 %v94, %v93
    %v109 = vpack.c.b16 %v96, %v95
    %v110 = vpack.c.b16 %v98, %v97
    %v111 = vpack.c.b16 %v100, %v99
    %v112 = vpack.c.b16 %v102, %v101
    %v113 = vpack.c.b16 %v104, %v103
    %v114 = vpack.c.b16 %v106, %v105
    %123 = vmatprep.subr.bf16.mxu0 0
    %124 = vmatpush1.bf16.msra.mxu0 %v107
    %125 = vmatprep.subr.bf16.mxu0 0
    %126 = vmatpush1.bf16.msra.mxu0 %v108
    %127 = vmatprep.subr.bf16.mxu0 0
    %128 = vmatpush1.bf16.msra.mxu0 %v109
    %129 = vmatprep.subr.bf16.mxu0 0
    %130 = vmatpush1.bf16.msra.mxu0 %v110
    %131 = vmatprep.subr.bf16.mxu0 0
    %132 = vmatpush1.bf16.msra.mxu0 %v111
    %133 = vmatprep.subr.bf16.mxu0 0
    %134 = vmatpush1.bf16.msra.mxu0 %v112
    %135 = vmatprep.subr.bf16.mxu0 0
    %136 = vmatpush1.bf16.msra.mxu0 %v113
    %137 = vmatprep.subr.bf16.mxu0 0
    %138 = vmatpush1.bf16.msra.mxu0 %v114
    %139 = vmatprep.subr.bf16.mxu0 0
    %140 = vmatpush1.bf16.msra.mxu0 0
    %141 = vmatprep.subr.bf16.mxu0 0
    %142 = vmatpush1.bf16.msra.mxu0 0
    %143 = vmatprep.subr.bf16.mxu0 0
    %144 = vmatpush1.bf16.msra.mxu0 0
    %145 = vmatprep.subr.bf16.mxu0 0
    %146 = vmatpush1.bf16.msra.mxu0 0
    %147 = vmatprep.subr.bf16.mxu0 0
    %148 = vmatpush1.bf16.msra.mxu0 0
    %149 = vmatprep.subr.bf16.mxu0 0
    %150 = vmatpush1.bf16.msra.mxu0 0
    %151 = vmatprep.subr.bf16.mxu0 0
    %152 = vmatpush1.bf16.msra.mxu0 0
    %153 = vmatprep.subr.bf16.mxu0 0
    %154 = vmatpush1.bf16.msra.mxu0 0
    %155 = vmatprep.mubr.bf16.mxu0 0
    %156 = vmatmul.mubr.bf16.gmra.mrb[0].mxu0 %v73
    %v157 = vpop.f32.mrb[0].mxu0
    %v158 = vadd.f32 %v67, %v157
    %v159 = vpop.f32.mrb[0].mxu0
    %v160 = vpop.f32.mrb[0].mxu0
    %v161 = vadd.f32 %v67, %v160
    %v162 = vpop.f32.mrb[0].mxu0
    %163 = vdwg.mxu0
    %v164 = vmul.f32 %v158, 0.5
    %v165 = vmul.f32 %v161, 0.5
    %v166 = vmul.f32 %v158, 0.70710677
    %v167 = vmul.f32 %v161, 0.70710677
    %v168 = verf.f32.pop %v166
    %v169 = verf.f32.pop %v167
    %v170 = vadd.f32 %v168, 1.0
    %v171 = vadd.f32 %v169, 1.0
    %v172 = vmul.f32 %v164, %v170
    %v173 = vmul.f32 %v165, %v171
    %v174 = vpack.c.bf16 %v173, %v172
    %v176 = vunpack.c.l.b16 %v174
    %v177 = vunpack.c.h.b16 %v174
    %v178 = vpack.c.b16 %v176, %v176
    %v179 = vpack.c.b16 %v177, %v177
    %182 = vst [vmem:[#allocation7] sm:$0xf] %v178
    %183 = vst [vmem:[#allocation7 + $0x4] sm:$0xf] %v179
    // Predicated region
    $region22: #{tpu_custom_call.1} parent=1 // pred_check
      _
    $region23: #{tpu_custom_call.1} parent=1 // pred_check_branch
      %185 = sbr.rel (0) target = $region25
    $region24: #{tpu_custom_call.1} parent=1 // pred_region
      %s187 = ssub.s32 128, 128
      %188 = vsyncadd [#allocation4], %s187
      %s189 = sshll.u32 [#allocation7], 4
      %s190 = int_to_ptr.vmem [resolvable:$true] %s189
      %195 = dma.vmem_to_hbm [thread:$0]  %s190, 128, %s3, [#allocation4], 64, 64, 4
    $region25: #{tpu_custom_call.1} parent=1 // pred_fallthru
      _
    // Predicated region
    $region26: #{tpu_custom_call.1} parent=1 // pred_check
      _
    $region27: #{tpu_custom_call.1} parent=1 // pred_check_branch
      %197 = sbr.rel (0) target = $region29
    $region28: #{tpu_custom_call.1} parent=1 // pred_region
      %198 = dma.done [#allocation4], 128
    $region29: #{tpu_custom_call.1} parent=1 // pred_fallthru
      _
    %199 = vsyncpa [#allocation3], 1
    %200 = vsyncpa [#allocation6], 1
    %201 = vsyncpa [#allocation4], 1

</llo_original>
